<compile_context>
chip_gen: v7x
topology: tpu7x:2x2x1
jax: 0.10.0
libtpu: 0.0.40
codegen_flags: <defaults>
</compile_context>

<pallas_src>
import jax
import jax.numpy as jnp
from jax import lax
from jax.experimental import pallas as pl
from jax.experimental.pallas import tpu as pltpu


def _round_up(x: int, m: int) -> int:
    return ((x + m - 1) // m) * m


def _vmem_bytes(tb: int, tk: int, d: int) -> int:
    """Rough live-VMEM estimate (double buffers + lane/sublane padding)."""
    d_pad = _round_up(max(d, 1), 128)
    return 4 * (2 * tb * tk          # x_llm double buffer
                + 2 * 8 * tk         # w1 row double buffer (sublane padded)
                + 2 * tb * d_pad     # x_fmri double buffer (resident per row blk)
                + 2 * 8 * d_pad      # w2 row
                + tb * 128           # lane-dense accumulator scratch
                + 2 * tb * 128)      # output double buffer (lane padded)


def _make_kernel(*, tk: int, k_llm: int):
    """Builds the fused dual-matvec kernel for a static K-tile width `tk`."""
    chunked = (tk % 128 == 0)
    need_mask = chunked and (k_llm % tk != 0)
    n_chunks = tk // 128 if chunked else 0

    def kernel(x_ref, w1_ref, xf_ref, w2_ref, b_ref, o_ref, acc_ref):
        # x_ref  : (TB, TK)  f32 VMEM  K-streamed slab of flattened LLM features
        # w1_ref : (1,  TK)  f32 VMEM  matching tile of the LLM weight row (zero padded)
        # xf_ref : (TB, D)   f32 VMEM  fMRI features, resident across the K axis
        # w2_ref : (1,  D)   f32 VMEM  fMRI weight row, resident
        # b_ref  : (1,  1)   f32 SMEM  folded bias (b1 + b2)
        # o_ref  : (TB, 1)   f32 VMEM  output column (written once, at k == last)
        # acc_ref: (TB, 128) f32 VMEM  lane-dense accumulator (VPU adds; one XLU
        #                              cross-lane reduce per row block at the end)
        k = pl.program_id(1)

        @pl.when(k == 0)
        def _():
            acc_ref[...] = jnp.zeros_like(acc_ref)

        if chunked:
            if need_mask:
                base = k * tk
            for j in range(n_chunks):        # static, 128-aligned views -> free
                lo, hi = j * 128, (j + 1) * 128
                xj = x_ref[:, lo:hi]
                if need_mask:
                    col = base + lo + lax.broadcasted_iota(jnp.int32, xj.shape, 1)
                    xj = jnp.where(col < k_llm, xj, 0.0)
                acc_ref[...] += xj * w1_ref[:, lo:hi]
        else:
            # Small-K single-block fallback (TK == K_llm, not a multiple of 128):
            # the block equals the full array dim, so no OOB reads and no mask.
            acc_ref[:, 0:1] += jnp.sum(x_ref[...] * w1_ref[...],
                                       axis=-1, keepdims=True)

        @pl.when(k == pl.num_programs(1) - 1)
        def _():
            llm = jnp.sum(acc_ref[...], axis=-1, keepdims=True)
            fmri = jnp.sum(xf_ref[...] * w2_ref[...], axis=-1, keepdims=True)
            o_ref[...] = llm + fmri + b_ref[0, 0]

    return kernel


@jax.jit
def delayed_embedding_linear_forward(x_llm, x_fmri, w1, b1, w2, b2):
    """Forward pass of DelayedEmbeddingLinearModelMultiFeature.

    x_llm : (B, T, F) f32
    x_fmri: (B, D)    f32
    w1    : (1, T*F)  f32   (nn.Linear(T*F, 1) weight)
    b1    : (1,)      f32
    w2    : (1, D)    f32   (nn.Linear(D, 1) weight)
    b2    : (1,)      f32
    returns (B, 1) f32
    """
    B, T, F = x_llm.shape
    D = x_fmri.shape[-1]
    K = T * F

    # Free, contiguous reshape — no HBM copy of the activations.
    x_flat = x_llm.reshape(B, K)
    w1_row = w1.reshape(1, K).astype(jnp.float32)
    w2_row = w2.reshape(1, D).astype(jnp.float32)
    bias = (b1.reshape(()) + b2.reshape(())).reshape(1, 1).astype(jnp.float32)
    # TODO(synk): accept bf16 activations and upcast per-tile inside the kernel
    # (f32 accumulate) to halve HBM bytes on the dominant x stream.

    # --- Tile selection ------------------------------------------------------
    if K % 128 == 0 or K > 4096:
        TK = min(4096, _round_up(K, 128))    # big steps amortize per-step cost
    else:
        TK = K                               # single K block equal to full dim

    if B <= 8:
        TB = _round_up(max(B, 1), 8)
    else:
        # >= 2 row blocks so the "parallel" i axis shards across both v7x TCs.
        TB = min(512, _round_up(pl.cdiv(B, 2), 8))

    # Keep live VMEM under ~40 MiB (v7x has only 64 MiB physical).
    budget = 40 << 20
    while _vmem_bytes(TB, TK, D) > budget and TK % 128 == 0 and TK > 512:
        TK //= 2
    while _vmem_bytes(TB, TK, D) > budget and TB > 8:
        TB = max(8, _round_up(TB // 2, 8))
    # TODO(synk): tile the fMRI feature axis too if D ever gets so large that a
    # resident (TB, D) block cannot fit in VMEM even at TB = 8.

    B_pad = _round_up(B, TB)
    K_pad = _round_up(K, TK)
    n_k = K_pad // TK

    x_fmri_in = x_fmri
    if B_pad != B:
        # At most TB-1 pad rows; padded rows are sliced off after the call.
        # TODO(synk): in-kernel row masking would avoid this copy for huge,
        # non-multiple-of-TB batch sizes.
        x_flat = jnp.pad(x_flat, ((0, B_pad - B), (0, 0)))
        x_fmri_in = jnp.pad(x_fmri, ((0, B_pad - B), (0, 0)))
    if K_pad != K:
        # Only the tiny (1, K) weight row is zero-padded; the (B, K) activations
        # are NOT padded — the ragged final K tile is masked inside the kernel.
        w1_row = jnp.pad(w1_row, ((0, 0), (0, K_pad - K)))

    kernel = _make_kernel(tk=TK, k_llm=K)
    vmem_limit = int(min(_vmem_bytes(TB, TK, D) + (16 << 20), 56 << 20))

    # TODO(synk): for small-K / huge-B regimes, emit a lane-dense (1, TB) output
    # row instead of the (TB, 1) column to avoid masked partial stores.
    out = pl.pallas_call(
        kernel,
        out_shape=jax.ShapeDtypeStruct((B_pad, 1), jnp.float32),
        grid_spec=pltpu.PrefetchScalarGridSpec(
            num_scalar_prefetch=0,
            grid=(B_pad // TB, n_k),
            in_specs=[
                pl.BlockSpec((TB, TK), lambda i, k: (i, k)),   # x_llm, K-streamed
                pl.BlockSpec((1, TK), lambda i, k: (0, k)),    # w1 row tile
                pl.BlockSpec((TB, D), lambda i, k: (i, 0)),    # x_fmri, resident
                pl.BlockSpec((1, D), lambda i, k: (0, 0)),     # w2 row, resident
                pl.BlockSpec((1, 1), lambda i, k: (0, 0),
                             memory_space=pltpu.MemorySpace.SMEM),  # folded bias
            ],
            out_specs=pl.BlockSpec((TB, 1), lambda i, k: (i, 0)),
            scratch_shapes=[pltpu.VMEM((TB, 128), jnp.float32)],
        ),
        compiler_params=pltpu.CompilerParams(
            dimension_semantics=("parallel", "arbitrary"),
            vmem_limit_bytes=vmem_limit,
        ),
        cost_estimate=pl.CostEstimate(
            flops=2 * B_pad * (K + D),
            transcendentals=0,
            bytes_accessed=4 * (B_pad * K + B_pad * D + K_pad + D + B_pad),
        ),
    )(x_flat, w1_row, x_fmri_in, w2_row, bias)

    return out[:B]


def _reference_forward(x_llm, x_fmri, w1, b1, w2, b2):
    B, T, F = x_llm.shape
    xl_flat = x_llm.reshape(B, T * F)
    return xl_flat @ w1.reshape(1, -1).T + b1 + x_fmri @ w2.reshape(1, -1).T + b2


if __name__ == "__main__":
    key = jax.random.PRNGKey(0)
    k_llm, k_fmri, k_w1, k_b1, k_w2, k_b2 = jax.random.split(key, 6)

    # Small shapes: B=8 samples, T=8 delayed timesteps, F=32 LLM features,
    # D=16 fMRI features  ->  K_llm = 8*32 = 256.
    B, T, F, D = 8, 8, 32, 16

    x_llm = jax.random.normal(k_llm, (B, T, F), dtype=jnp.float32)
    x_fmri = jax.random.normal(k_fmri, (B, D), dtype=jnp.float32)

    # Deterministic parameter init, same layout as nn.Linear(T*F, 1) / nn.Linear(D, 1).
    bound1 = 1.0 / jnp.sqrt(T * F)
    bound2 = 1.0 / jnp.sqrt(D)
    w1 = jax.random.uniform(k_w1, (1, T * F), jnp.float32, -bound1, bound1)
    b1 = jax.random.uniform(k_b1, (1,), jnp.float32, -bound1, bound1)
    w2 = jax.random.uniform(k_w2, (1, D), jnp.float32, -bound2, bound2)
    b2 = jax.random.uniform(k_b2, (1,), jnp.float32, -bound2, bound2)

    y = delayed_embedding_linear_forward(x_llm, x_fmri, w1, b1, w2, b2)
    y = jax.block_until_ready(y)

    y_ref = _reference_forward(x_llm, x_fmri, w1, b1, w2, b2)
    assert y.shape == (B, 1), y.shape
    assert jnp.allclose(y, y_ref, atol=1e-4, rtol=1e-4), (y, y_ref)

    print("KERNEL_OK")
</pallas_src>

<mosaic_0001>
module attributes {stable_mosaic.version = 11 : i64} {
  func.func @kernel(%arg0: i32, %arg1: i32, %arg2: memref<8x256xf32, #tpu.memory_space<vmem>>, %arg3: memref<1x256xf32, #tpu.memory_space<vmem>>, %arg4: memref<8x16xf32, #tpu.memory_space<vmem>>, %arg5: memref<1x16xf32, #tpu.memory_space<vmem>>, %arg6: memref<1x1xf32, #tpu.memory_space<smem>>, %arg7: memref<8x1xf32, #tpu.memory_space<vmem>>, %arg8: memref<8x128xf32, #tpu.memory_space<vmem>>) attributes {dimension_semantics = [#tpu.dimension_semantics<parallel>, #tpu.dimension_semantics<arbitrary>], iteration_bounds = array<i64: 1, 1>, scalar_prefetch = 0 : i64, scratch_operands = 1 : i64, tpu.core_type = #tpu.core_type<tc>, window_params = [{transform_indices = @transform_0, window_bounds = array<i64: 8, 256>}, {transform_indices = @transform_1, window_bounds = array<i64: 1, 256>}, {transform_indices = @transform_2, window_bounds = array<i64: 8, 16>}, {pipeline_mode = #tpu.pipeline_mode<synchronous>, transform_indices = @transform_3, window_bounds = array<i64: 1, 16>}, {transform_indices = @transform_4, window_bounds = array<i64: 1, 1>}, {transform_indices = @transform_5, window_bounds = array<i64: 8, 1>}]} {
    %c0_i32 = arith.constant 0 : i32
    %0 = arith.cmpi eq, %arg1, %c0_i32 : i32
    %1 = arith.extui %0 : i1 to i32
    %c0_i32_0 = arith.constant 0 : i32
    %2 = arith.cmpi ne, %1, %c0_i32_0 : i32
    scf.if %2 {
      %cst = arith.constant 0.000000e+00 : f32
      %20 = vector.broadcast %cst : f32 to vector<8x128xf32>
      %c0_17 = arith.constant 0 : index
      %c0_18 = arith.constant 0 : index
      %21 = vector.load %arg8[%c0_17, %c0_18] : memref<8x128xf32, #tpu.memory_space<vmem>>, vector<8x128xf32>
      tpu.vector_store %arg8[%c0_17, %c0_18], %20 {strides = array<i32>} : memref<8x128xf32, #tpu.memory_space<vmem>>, vector<8x128xf32>,
    } else {
    }
    %c0 = arith.constant 0 : index
    %c0_1 = arith.constant 0 : index
    %3 = vector.load %arg2[%c0, %c0_1] : memref<8x256xf32, #tpu.memory_space<vmem>>, vector<8x128xf32>
    %c0_2 = arith.constant 0 : index
    %c0_3 = arith.constant 0 : index
    %4 = vector.load %arg8[%c0_2, %c0_3] : memref<8x128xf32, #tpu.memory_space<vmem>>, vector<8x128xf32>
    %c0_4 = arith.constant 0 : index
    %c0_5 = arith.constant 0 : index
    %5 = vector.load %arg3[%c0_4, %c0_5] : memref<1x256xf32, #tpu.memory_space<vmem>>, vector<1x128xf32>
    %6 = vector.broadcast %5 : vector<1x128xf32> to vector<8x128xf32>
    %7 = arith.mulf %3, %6 : vector<8x128xf32>
    %8 = arith.addf %4, %7 : vector<8x128xf32>
    %c0_6 = arith.constant 0 : index
    %c0_7 = arith.constant 0 : index
    %9 = vector.load %arg8[%c0_6, %c0_7] : memref<8x128xf32, #tpu.memory_space<vmem>>, vector<8x128xf32>
    tpu.vector_store %arg8[%c0_6, %c0_7], %8 {strides = array<i32>} : memref<8x128xf32, #tpu.memory_space<vmem>>, vector<8x128xf32>,
    %c0_8 = arith.constant 0 : index
    %c128 = arith.constant 128 : index
    %10 = vector.load %arg2[%c0_8, %c128] : memref<8x256xf32, #tpu.memory_space<vmem>>, vector<8x128xf32>
    %c0_9 = arith.constant 0 : index
    %c0_10 = arith.constant 0 : index
    %11 = vector.load %arg8[%c0_9, %c0_10] : memref<8x128xf32, #tpu.memory_space<vmem>>, vector<8x128xf32>
    %c0_11 = arith.constant 0 : index
    %c128_12 = arith.constant 128 : index
    %12 = vector.load %arg3[%c0_11, %c128_12] : memref<1x256xf32, #tpu.memory_space<vmem>>, vector<1x128xf32>
    %13 = vector.broadcast %12 : vector<1x128xf32> to vector<8x128xf32>
    %14 = arith.mulf %10, %13 : vector<8x128xf32>
    %15 = arith.addf %11, %14 : vector<8x128xf32>
    %c0_13 = arith.constant 0 : index
    %c0_14 = arith.constant 0 : index
    %16 = vector.load %arg8[%c0_13, %c0_14] : memref<8x128xf32, #tpu.memory_space<vmem>>, vector<8x128xf32>
    tpu.vector_store %arg8[%c0_13, %c0_14], %15 {strides = array<i32>} : memref<8x128xf32, #tpu.memory_space<vmem>>, vector<8x128xf32>,
    %c0_i32_15 = arith.constant 0 : i32
    %17 = arith.cmpi eq, %arg1, %c0_i32_15 : i32
    %18 = arith.extui %17 : i1 to i32
    %c0_i32_16 = arith.constant 0 : i32
    %19 = arith.cmpi ne, %18, %c0_i32_16 : i32
    scf.if %19 {
      %c0_17 = arith.constant 0 : index
      %c0_18 = arith.constant 0 : index
      %20 = vector.load %arg8[%c0_17, %c0_18] : memref<8x128xf32, #tpu.memory_space<vmem>>, vector<8x128xf32>
      %cst = arith.constant dense<0.000000e+00> : vector<8xf32>
      %21 = vector.multi_reduction <add>, %20, %cst [1] : vector<8x128xf32> to vector<8xf32>
      %22 = vector.shape_cast %21 : vector<8xf32> to vector<8x1xf32>
      %c0_19 = arith.constant 0 : index
      %c0_20 = arith.constant 0 : index
      %23 = vector.load %arg4[%c0_19, %c0_20] : memref<8x16xf32, #tpu.memory_space<vmem>>, vector<8x16xf32>
      %c0_21 = arith.constant 0 : index
      %c0_22 = arith.constant 0 : index
      %24 = vector.load %arg5[%c0_21, %c0_22] : memref<1x16xf32, #tpu.memory_space<vmem>>, vector<1x16xf32>
      %25 = vector.broadcast %24 : vector<1x16xf32> to vector<8x16xf32>
      %26 = arith.mulf %23, %25 : vector<8x16xf32>
      %cst_23 = arith.constant dense<0.000000e+00> : vector<8xf32>
      %27 = vector.multi_reduction <add>, %26, %cst_23 [1] : vector<8x16xf32> to vector<8xf32>
      %28 = vector.shape_cast %27 : vector<8xf32> to vector<8x1xf32>
      %29 = arith.addf %22, %28 : vector<8x1xf32>
      %c0_24 = arith.constant 0 : index
      %c0_25 = arith.constant 0 : index
      %30 = memref.load %arg6[%c0_24, %c0_25] : memref<1x1xf32, #tpu.memory_space<smem>>
      %31 = vector.broadcast %30 : f32 to vector<8x1xf32>
      %32 = arith.addf %29, %31 : vector<8x1xf32>
      %c0_26 = arith.constant 0 : index
      %c0_27 = arith.constant 0 : index
      %33 = vector.load %arg7[%c0_26, %c0_27] : memref<8x1xf32, #tpu.memory_space<vmem>>, vector<8x1xf32>
      tpu.vector_store %arg7[%c0_26, %c0_27], %32 {strides = array<i32>} : memref<8x1xf32, #tpu.memory_space<vmem>>, vector<8x1xf32>,
    } else {
    }
    return
  }
  func.func @transform_0(%arg0: i32, %arg1: i32) -> (i32, i32) {
    %c0_i32 = arith.constant 0 : i32
    return %arg0, %arg1 : i32, i32
  }
  func.func @transform_1(%arg0: i32, %arg1: i32) -> (i32, i32) {
    %c0_i32 = arith.constant 0 : i32
    %c0_i32_0 = arith.constant 0 : i32
    return %c0_i32, %arg1 : i32, i32
  }
  func.func @transform_2(%arg0: i32, %arg1: i32) -> (i32, i32) {
    %c0_i32 = arith.constant 0 : i32
    %c0_i32_0 = arith.constant 0 : i32
    return %arg0, %c0_i32 : i32, i32
  }
  func.func @transform_3(%arg0: i32, %arg1: i32) -> (i32, i32) {
    %c0_i32 = arith.constant 0 : i32
    %c0_i32_0 = arith.constant 0 : i32
    %c0_i32_1 = arith.constant 0 : i32
    return %c0_i32, %c0_i32_0 : i32, i32
  }
  func.func @transform_4(%arg0: i32, %arg1: i32) -> (i32, i32) {
    %c0_i32 = arith.constant 0 : i32
    %c0_i32_0 = arith.constant 0 : i32
    %c0_i32_1 = arith.constant 0 : i32
    return %c0_i32, %c0_i32_0 : i32, i32
  }
  func.func @transform_5(%arg0: i32, %arg1: i32) -> (i32, i32) {
    %c0_i32 = arith.constant 0 : i32
    %c0_i32_0 = arith.constant 0 : i32
    return %arg0, %c0_i32 : i32, i32
  }
}

</mosaic_0001>

<llo_original>
// kernel: delayed_embedding_linear_forward.1
$region0: #{delayed_embedding_linear_forward.1}
  #allocation0 [shape = 'u32[]', space=smem, size = 0x4, offset = 0x4, fixed_abs, tag = 'smem constant byte address 0x4 - core index']
  #allocation1 [shape = 'u32[144,128]{1,0:T(1,128)}', space=vmem, size = 0x12000, scoped, tag = 'internal scratch']
  #allocation2 [shape = 'f32[8,128]{1,0:T(8,128)}', space=vmem, size = 0x1000, scoped, tag = 'scratch operand']
  #allocation3 [shape = 'f32[1,1]{1,0:T(1,128)S(6)}', space=smem, size = 0x200, scoped, tag = 'scoped memory for delayed_embedding_linear_forward.1']
  %s0 = inlined_call_operand.vmem [shape: f32[8,256], index: 0, kind: input, shape index: {}]
  %s1 = inlined_call_operand.vmem [shape: f32[1,256], index: 1, kind: input, shape index: {}]
  %s2 = inlined_call_operand.vmem [shape: f32[8,16], index: 2, kind: input, shape index: {}]
  %s3 = inlined_call_operand.vmem [shape: f32[1,16], index: 3, kind: input, shape index: {}]
  %s4 = inlined_call_operand.<no memory space> [shape: f32[1,1], index: 4, kind: input, shape index: {}]
  %s5 = inlined_call_operand.vmem [shape: f32[8,1], index: 5, kind: output, shape index: {}]
  %s6 = sld [smem:[#allocation0]]
  $region38: #{delayed_embedding_linear_forward.1} parent=0
    _
  %s8 = ssub.s32 1, %s6
  %s9 = scalar_select 0, %s8, %s6
  %10 = sst [smem:[#allocation3]] %s4
  // Predicated region
  $region2: #{delayed_embedding_linear_forward.1} parent=0 // pred_check
    _
  $region3: #{delayed_embedding_linear_forward.1} parent=0 // pred_check_branch
    %12 = sbr.rel (0) target = $region5
  $region4: #{delayed_embedding_linear_forward.1} parent=0 // pred_region
    _
  $region5: #{delayed_embedding_linear_forward.1} parent=0 // pred_fallthru
    _
  // Predicated region
  $region6: #{delayed_embedding_linear_forward.1} parent=0 // pred_check
    _
  $region7: #{delayed_embedding_linear_forward.1} parent=0 // pred_check_branch
    %14 = sbr.rel (0) target = $region9
  $region8: #{delayed_embedding_linear_forward.1} parent=0 // pred_region
    _
  $region9: #{delayed_embedding_linear_forward.1} parent=0 // pred_fallthru
    _
  // Predicated region
  $region10: #{delayed_embedding_linear_forward.1} parent=0 // pred_check
    _
  $region11: #{delayed_embedding_linear_forward.1} parent=0 // pred_check_branch
    %16 = sbr.rel (0) target = $region13
  $region12: #{delayed_embedding_linear_forward.1} parent=0 // pred_region
    _
  $region13: #{delayed_embedding_linear_forward.1} parent=0 // pred_fallthru
    _
  // Predicated region
  $region14: #{delayed_embedding_linear_forward.1} parent=0 // pred_check
    _
  $region15: #{delayed_embedding_linear_forward.1} parent=0 // pred_check_branch
    %18 = sbr.rel (0) target = $region17
  $region16: #{delayed_embedding_linear_forward.1} parent=0 // pred_region
    _
  $region17: #{delayed_embedding_linear_forward.1} parent=0 // pred_fallthru
    _
  // Predicated region
  $region18: #{delayed_embedding_linear_forward.1} parent=0 // pred_check
    _
  $region19: #{delayed_embedding_linear_forward.1} parent=0 // pred_check_branch
    %20 = sbr.rel (0) target = $region21
  $region20: #{delayed_embedding_linear_forward.1} parent=0 // pred_region
    _
  $region21: #{delayed_embedding_linear_forward.1} parent=0 // pred_fallthru
    _
  %p21 = scmp.eq.s32.totalorder 0, 0
  // Predicated region
  $region22: #{delayed_embedding_linear_forward.1} parent=0 // pred_check
    %p22 = pneg %p21
  $region23: #{delayed_embedding_linear_forward.1} parent=0 // pred_check_branch
    %24 = sbr.rel (%p22) target = $region25
  $region24: #{delayed_embedding_linear_forward.1} parent=0 // pred_region
    %25 = vst [vmem:[#allocation2] sm:$0xff] 0.0
  $region25: #{delayed_embedding_linear_forward.1} parent=0 // pred_fallthru
    _
  %v26 = vld [vmem:[%s0] sm:$0xff]
  %v27 = vld [vmem:[#allocation2] sm:$0xff]
  %v28 = vld [vmem:[%s1] sm:$0x1]
  %v30 = vlaneseq
  %v31 = vshrl.u32 %v30, 7
  %v32 = vsub.s32 0, %v31
  %v33 = vrot.slane %v28, %v32
  %v35 = vmul.f32 %v26, %v33
  %v36 = vadd.f32 %v27, %v35
  %37 = vst [vmem:[#allocation2] sm:$0xff] %v36
  %v38 = vld [vmem:[%s0 + $0x8] sm:$0xff]
  %v39 = vld [vmem:[#allocation2] sm:$0xff]
  %v40 = vld [vmem:[%s1 + $0x1] sm:$0x1]
  %v42 = vlaneseq
  %v43 = vshrl.u32 %v42, 7
  %v44 = vsub.s32 0, %v43
  %v45 = vrot.slane %v40, %v44
  %v47 = vmul.f32 %v38, %v45
  %v48 = vadd.f32 %v39, %v47
  %49 = vst [vmem:[#allocation2] sm:$0xff] %v48
  // Predicated region
  $region26: #{delayed_embedding_linear_forward.1} parent=0 // pred_check
    %p50 = pneg %p21
  $region27: #{delayed_embedding_linear_forward.1} parent=0 // pred_check_branch
    %52 = sbr.rel (%p50) target = $region29
  $region28: #{delayed_embedding_linear_forward.1} parent=0 // pred_region
    %v53 = vld [vmem:[#allocation2] sm:$0xff]
    %54 = vadd.xlane.f32.xlu0 %v53
    %v55 = vpop.xlane.xlu0 %54
    %v56 = vld [vmem:[%s2] sm:$0xff]
    %v57 = vld [vmem:[%s3] sm:$0x1]
    %v59 = vlaneseq
    %v60 = vshrl.u32 %v59, 7
    %v61 = vsub.s32 0, %v60
    %v62 = vrot.slane %v57, %v61
    %v64 = vmul.f32 %v56, %v62
    %vm65 = vcmask 130048
    %v66 = vsel %vm65, %v64, 0.0
    %67 = vadd.xlane.f32.xlu0 %v66
    %v68 = vpop.xlane.xlu0 %67
    %v69 = vadd.f32 %v55, %v68
    %s70 = sld [smem:[#allocation3]]
    %v71 = vstv %s70
    %v72 = vadd.f32 %v69, %v71
    %vm73 = vcmask 7168
    %74 = vst.msk [vmem:[%s5] sm:$0xff] %vm73, %v72
  $region29: #{delayed_embedding_linear_forward.1} parent=0 // pred_fallthru
    _
  // Predicated region
  $region30: #{delayed_embedding_linear_forward.1} parent=0 // pred_check
    _
  $region31: #{delayed_embedding_linear_forward.1} parent=0 // pred_check_branch
    %76 = sbr.rel (0) target = $region33
  $region32: #{delayed_embedding_linear_forward.1} parent=0 // pred_region
    _
  $region33: #{delayed_embedding_linear_forward.1} parent=0 // pred_fallthru
    _
  // Predicated region
  $region34: #{delayed_embedding_linear_forward.1} parent=0 // pred_check
    _
  $region35: #{delayed_embedding_linear_forward.1} parent=0 // pred_check_branch
    %78 = sbr.rel (0) target = $region37
  $region36: #{delayed_embedding_linear_forward.1} parent=0 // pred_region
    _
  $region37: #{delayed_embedding_linear_forward.1} parent=0 // pred_fallthru
    _

</llo_original>
